<compile_context>
chip_gen: v5e
topology: v5e:2x2
jax: 0.10.0
libtpu: 0.0.40
codegen_flags: <defaults>
</compile_context>

<pallas_src>
import jax
import jax.numpy as jnp
from jax.experimental import pallas as pl
from jax.experimental.pallas import tpu as pltpu


def temporal_attention_kernel(whb_ref, feats_ref, ut_ref, w_ref,
                              attn_ref, weights_ref):
    f = feats_ref[...]                                    # (TB, T, F), native dtype
    TB, T, F = f.shape
    Bk = ut_ref.shape[-1]

    # MXU matmul: fold batch*time into M -> (TB*T, F) @ (F, Bk).
    # Reshape first (layout-free when T % 8 == 0), then cast only the MXU
    # operand to the MXU dtype (bf16 by default); accumulate in f32.
    f2 = f.reshape(TB * T, F)
    uv = jnp.dot(f2.astype(ut_ref.dtype), ut_ref[...],
                 preferred_element_type=jnp.float32)      # (TB*T, Bk) f32

    # e = tanh(Wh + b + Uv); Wh+b arrives pre-computed as a (TB, 1, Bk) block
    # and broadcasts across the temporal axis.
    e = jnp.tanh(uv.reshape(TB, T, Bk) + whb_ref[...])    # (TB, T, Bk) f32

    # energies = e @ w.T done on the VPU (broadcast-multiply + lane reduce),
    # emitted lane-dense as (TB, T) -- no (..., 1) keepdims intermediates.
    energies = jnp.sum(e * w_ref[...], axis=-1)           # (TB, T) f32

    # TODO(synk): optional boolean `masks` path (energies[~masks] = -inf) not
    #             implemented; this kernel reproduces the masks=None branch.

    # Lane-dense, numerically stable softmax over the temporal axis.
    m = jnp.max(energies, axis=-1, keepdims=True)         # (TB, 1)
    p = jnp.exp(energies - m)                             # (TB, T)
    wts = p / jnp.sum(p, axis=-1, keepdims=True)          # (TB, T) f32

    weights_ref[...] = wts.astype(weights_ref.dtype)      # lane-dense store

    # Weighted feature sum in f32: one re-expand of wts for the lane broadcast
    # over F, then a sublane reduce over T.  feats stays in its native dtype
    # until this multiply (no full-tile f32 copy kept live).
    attn = jnp.sum(f.astype(jnp.float32) * wts[:, :, None], axis=1)   # (TB, F)
    attn_ref[...] = attn.astype(attn_ref.dtype)


def _round_up(x, m):
    return ((x + m - 1) // m) * m


def _choose_tb(B, T, F, Bk, feat_itemsize, batch_block,
               vmem_budget_bytes=24 * 1024 * 1024):
    """Pick the batch-tile size from a per-step VMEM budget (with double
    buffering), capped at batch_block and at a value that keeps >=2 grid
    blocks when B allows it (v7x megacore)."""
    lane = 128
    bk_pad = _round_up(Bk, lane)
    f_pad = _round_up(F, lane)
    t_pad = _round_up(T, 8)
    per_row = (
        2 * t_pad * f_pad * feat_itemsize      # feats input block (double-buffered)
        + t_pad * f_pad * 2                    # bf16 MXU-operand copy of the tile
        + t_pad * f_pad * 4                    # f32 product for the weighted sum
        + 2 * t_pad * bk_pad * 4               # uv / e intermediates (f32)
        + 2 * 8 * bk_pad * 4                   # Wh+b block (sublane-padded, dbl-buffered)
        + 2 * (f_pad * 4 + t_pad * 4)          # attn / weights outputs (dbl-buffered)
    )
    tb = max(8, vmem_budget_bytes // max(per_row, 1))
    tb = min(tb, batch_block, _round_up(B, 8))
    if B > 8:
        # keep at least 2 grid blocks so the "parallel" grid axis can be
        # sharded across v7x's two TensorCores.
        tb = min(tb, _round_up(pl.cdiv(B, 2), 8))
    return max(8, (tb // 8) * 8)


def temporal_attention(hidden, feats, W, U, b, w, *, batch_block=128,
                       mxu_dtype=jnp.bfloat16):
    """hidden: (B, H), feats: (B, T, F).
    W: (Bk, H), U: (Bk, F), b: (Bk,), w: (1, Bk)  (PyTorch nn.Linear layout).
    Returns (attn_feats (B, F), weights (B, T, 1) f32)."""
    B, H = hidden.shape
    _, T, F = feats.shape
    Bk = b.shape[0]

    # Hoist the hidden projection (+ bias) into one full-batch XLA matmul.
    whb = (hidden.astype(jnp.float32) @ W.T.astype(jnp.float32)
           + b.astype(jnp.float32))                  # (B, Bk)
    whb3 = whb.reshape(B, 1, Bk)

    ut = U.T.astype(mxu_dtype)                       # (F, Bk) MXU operand
    w_row = w.reshape(1, Bk).astype(jnp.float32)

    TB = _choose_tb(B, T, F, Bk, feats.dtype.itemsize, batch_block)
    grid = pl.cdiv(B, TB)                            # no feats padding: Pallas
                                                     # handles the partial block

    attn, weights2d = pl.pallas_call(
        temporal_attention_kernel,
        out_shape=(jax.ShapeDtypeStruct((B, F), feats.dtype),
                   jax.ShapeDtypeStruct((B, T), jnp.float32)),
        grid_spec=pltpu.PrefetchScalarGridSpec(
            num_scalar_prefetch=0,
            grid=(grid,),
            in_specs=[
                pl.BlockSpec((TB, 1, Bk), lambda bb: (bb, 0, 0)),   # Wh + b
                pl.BlockSpec((TB, T, F), lambda bb: (bb, 0, 0)),    # feats
                pl.BlockSpec((F, Bk), lambda bb: (0, 0)),           # U^T
                pl.BlockSpec((1, Bk), lambda bb: (0, 0)),           # w row
            ],
            out_specs=[
                pl.BlockSpec((TB, F), lambda bb: (bb, 0)),          # attn  (lane-dense)
                pl.BlockSpec((TB, T), lambda bb: (bb, 0)),          # weights (lane-dense)
            ],
        ),
        compiler_params=pltpu.CompilerParams(
            dimension_semantics=("parallel",),
            vmem_limit_bytes=48 * 1024 * 1024),
    )(whb3, feats, ut, w_row)

    # Re-expand weights to the module's (B, T, 1) shape (f32 softmax output).
    return attn, weights2d[:, :, None]


def temporal_attention_ref(hidden, feats, W, U, b, w):
    """Pure-JAX reference mirroring the PyTorch forward (masks=None)."""
    Wh = hidden @ W.T                              # (B, Bk)
    Uv = jnp.einsum("btf,kf->btk", feats, U)       # (B, T, Bk)
    e = jnp.tanh(Wh[:, None, :] + Uv + b)          # (B, T, Bk)
    energies = jnp.einsum("btk,jk->btj", e, w)     # (B, T, 1)
    weights = jax.nn.softmax(energies, axis=1)     # (B, T, 1)
    attn = jnp.sum(feats * weights, axis=1)        # (B, F)
    return attn, weights


if __name__ == "__main__":
    # Small deterministic configuration consistent with the module.
    B, T = 2, 8
    hidden_size, feat_size, bottleneck_size = 32, 16, 32

    key = jax.random.PRNGKey(0)
    k_h, k_f, k_W, k_U, k_w = jax.random.split(key, 5)

    hidden = jax.random.normal(k_h, (B, hidden_size), dtype=jnp.float32)
    feats = jax.random.normal(k_f, (B, T, feat_size), dtype=jnp.float32)

    # Deterministic parameter init (PyTorch-Linear-style uniform bounds).
    W = jax.random.uniform(k_W, (bottleneck_size, hidden_size), jnp.float32,
                           -1.0 / hidden_size ** 0.5, 1.0 / hidden_size ** 0.5)
    U = jax.random.uniform(k_U, (bottleneck_size, feat_size), jnp.float32,
                           -1.0 / feat_size ** 0.5, 1.0 / feat_size ** 0.5)
    b = jnp.ones((bottleneck_size,), dtype=jnp.float32)   # torch.ones init
    w = jax.random.uniform(k_w, (1, bottleneck_size), jnp.float32,
                           -1.0 / bottleneck_size ** 0.5,
                           1.0 / bottleneck_size ** 0.5)

    attn_r, weights_r = temporal_attention_ref(hidden, feats, W, U, b, w)

    # 1) Default path: bf16 MXU operands, f32 accumulation -> loosened tolerance.
    attn_feats, weights = temporal_attention(hidden, feats, W, U, b, w)
    jax.block_until_ready((attn_feats, weights))
    assert attn_feats.shape == (B, feat_size)
    assert weights.shape == (B, T, 1)
    assert jnp.allclose(attn_feats, attn_r, atol=2e-2, rtol=2e-2)
    assert jnp.allclose(weights, weights_r, atol=2e-2, rtol=2e-2)

    # 2) Exact-semantics check: f32 MXU operands, tight tolerance.
    attn_f32, weights_f32 = temporal_attention(hidden, feats, W, U, b, w,
                                               mxu_dtype=jnp.float32)
    jax.block_until_ready((attn_f32, weights_f32))
    assert jnp.allclose(attn_f32, attn_r, atol=1e-5, rtol=1e-5)
    assert jnp.allclose(weights_f32, weights_r, atol=1e-5, rtol=1e-5)

    # 3) Ragged multi-block grid (B % TB != 0) exercising the unpadded partial
    #    last block and >=2 grid steps.
    B2 = 13
    k_h2, k_f2 = jax.random.split(jax.random.PRNGKey(1), 2)
    hidden2 = jax.random.normal(k_h2, (B2, hidden_size), dtype=jnp.float32)
    feats2 = jax.random.normal(k_f2, (B2, T, feat_size), dtype=jnp.float32)
    a2, w2 = temporal_attention(hidden2, feats2, W, U, b, w, batch_block=8)
    jax.block_until_ready((a2, w2))
    a2_r, w2_r = temporal_attention_ref(hidden2, feats2, W, U, b, w)
    assert a2.shape == (B2, feat_size)
    assert w2.shape == (B2, T, 1)
    assert jnp.allclose(a2, a2_r, atol=2e-2, rtol=2e-2)
    assert jnp.allclose(w2, w2_r, atol=2e-2, rtol=2e-2)

    print("KERNEL_OK")
</pallas_src>

<mosaic_0001>
module attributes {stable_mosaic.version = 11 : i64} {
  func.func @temporal_attention_kernel(%arg0: i32, %arg1: memref<8x1x32xf32, #tpu.memory_space<vmem>>, %arg2: memref<8x8x16xf32, #tpu.memory_space<vmem>>, %arg3: memref<16x32xbf16, #tpu.memory_space<vmem>>, %arg4: memref<1x32xf32, #tpu.memory_space<vmem>>, %arg5: memref<8x16xf32, #tpu.memory_space<vmem>>, %arg6: memref<8x8xf32, #tpu.memory_space<vmem>>) attributes {dimension_semantics = [#tpu.dimension_semantics<parallel>], iteration_bounds = array<i64: 1>, scalar_prefetch = 0 : i64, scratch_operands = 0 : i64, tpu.core_type = #tpu.core_type<tc>, window_params = [{transform_indices = @transform_0, window_bounds = array<i64: 8, 1, 32>}, {transform_indices = @transform_1, window_bounds = array<i64: 8, 8, 16>}, {pipeline_mode = #tpu.pipeline_mode<synchronous>, transform_indices = @transform_2, window_bounds = array<i64: 16, 32>}, {pipeline_mode = #tpu.pipeline_mode<synchronous>, transform_indices = @transform_3, window_bounds = array<i64: 1, 32>}, {transform_indices = @transform_4, window_bounds = array<i64: 8, 16>}, {transform_indices = @transform_5, window_bounds = array<i64: 8, 8>}]} {
    %c0 = arith.constant 0 : index
    %c0_0 = arith.constant 0 : index
    %c0_1 = arith.constant 0 : index
    %0 = vector.load %arg2[%c0, %c0_0, %c0_1] : memref<8x8x16xf32, #tpu.memory_space<vmem>>, vector<8x8x16xf32>
    %1 = vector.shape_cast %0 : vector<8x8x16xf32> to vector<64x16xf32>
    %2 = arith.truncf %1 : vector<64x16xf32> to vector<64x16xbf16>
    %c0_2 = arith.constant 0 : index
    %c0_3 = arith.constant 0 : index
    %3 = vector.load %arg3[%c0_2, %c0_3] : memref<16x32xbf16, #tpu.memory_space<vmem>>, vector<16x32xbf16>
    %cst = arith.constant dense<0.000000e+00> : vector<64x32xf32>
    %4 = tpu.matmul %2, %3, %cst {dimension_numbers = #tpu.dot_dimension_numbers<[1], [0], [0], [1], [0, 0, 1, 1], [], []>} : vector<64x16xbf16>, vector<16x32xbf16>, vector<64x32xf32> -> vector<64x32xf32>
    %5 = vector.shape_cast %4 : vector<64x32xf32> to vector<8x8x32xf32>
    %c0_4 = arith.constant 0 : index
    %c0_5 = arith.constant 0 : index
    %c0_6 = arith.constant 0 : index
    %6 = vector.load %arg1[%c0_4, %c0_5, %c0_6] : memref<8x1x32xf32, #tpu.memory_space<vmem>>, vector<8x1x32xf32>
    %7 = vector.broadcast %6 : vector<8x1x32xf32> to vector<8x8x32xf32>
    %8 = arith.addf %5, %7 : vector<8x8x32xf32>
    %9 = math.tanh %8 : vector<8x8x32xf32>
    %c0_7 = arith.constant 0 : index
    %c0_8 = arith.constant 0 : index
    %10 = vector.load %arg4[%c0_7, %c0_8] : memref<1x32xf32, #tpu.memory_space<vmem>>, vector<1x32xf32>
    %11 = vector.shape_cast %10 : vector<1x32xf32> to vector<1x1x32xf32>
    %12 = vector.broadcast %11 : vector<1x1x32xf32> to vector<8x8x32xf32>
    %13 = arith.mulf %9, %12 : vector<8x8x32xf32>
    %cst_9 = arith.constant dense<0.000000e+00> : vector<8x8xf32>
    %14 = vector.multi_reduction <add>, %13, %cst_9 [2] : vector<8x8x32xf32> to vector<8x8xf32>
    %cst_10 = arith.constant dense<0xFF800000> : vector<8xf32>
    %15 = vector.multi_reduction <maximumf>, %14, %cst_10 [1] : vector<8x8xf32> to vector<8xf32>
    %16 = vector.shape_cast %15 : vector<8xf32> to vector<8x1xf32>
    %17 = vector.broadcast %16 : vector<8x1xf32> to vector<8x8xf32>
    %18 = arith.subf %14, %17 : vector<8x8xf32>
    %19 = math.exp %18 : vector<8x8xf32>
    %cst_11 = arith.constant dense<0.000000e+00> : vector<8xf32>
    %20 = vector.multi_reduction <add>, %19, %cst_11 [1] : vector<8x8xf32> to vector<8xf32>
    %21 = vector.shape_cast %20 : vector<8xf32> to vector<8x1xf32>
    %22 = vector.broadcast %21 : vector<8x1xf32> to vector<8x8xf32>
    %23 = arith.divf %19, %22 : vector<8x8xf32>
    %c0_12 = arith.constant 0 : index
    %c0_13 = arith.constant 0 : index
    %24 = vector.load %arg6[%c0_12, %c0_13] : memref<8x8xf32, #tpu.memory_space<vmem>>, vector<8x8xf32>
    tpu.vector_store %arg6[%c0_12, %c0_13], %23 {strides = array<i32>} : memref<8x8xf32, #tpu.memory_space<vmem>>, vector<8x8xf32>,
    %25 = vector.shape_cast %23 : vector<8x8xf32> to vector<8x8x1xf32>
    %26 = vector.broadcast %25 : vector<8x8x1xf32> to vector<8x8x16xf32>
    %27 = arith.mulf %0, %26 : vector<8x8x16xf32>
    %cst_14 = arith.constant dense<0.000000e+00> : vector<8x16xf32>
    %28 = vector.multi_reduction <add>, %27, %cst_14 [1] : vector<8x8x16xf32> to vector<8x16xf32>
    %c0_15 = arith.constant 0 : index
    %c0_16 = arith.constant 0 : index
    %29 = vector.load %arg5[%c0_15, %c0_16] : memref<8x16xf32, #tpu.memory_space<vmem>>, vector<8x16xf32>
    tpu.vector_store %arg5[%c0_15, %c0_16], %28 {strides = array<i32>} : memref<8x16xf32, #tpu.memory_space<vmem>>, vector<8x16xf32>,
    return
  }
  func.func @transform_0(%arg0: i32) -> (i32, i32, i32) {
    %c0_i32 = arith.constant 0 : i32
    %c0_i32_0 = arith.constant 0 : i32
    %c0_i32_1 = arith.constant 0 : i32
    return %arg0, %c0_i32, %c0_i32_0 : i32, i32, i32
  }
  func.func @transform_1(%arg0: i32) -> (i32, i32, i32) {
    %c0_i32 = arith.constant 0 : i32
    %c0_i32_0 = arith.constant 0 : i32
    %c0_i32_1 = arith.constant 0 : i32
    return %arg0, %c0_i32, %c0_i32_0 : i32, i32, i32
  }
  func.func @transform_2(%arg0: i32) -> (i32, i32) {
    %c0_i32 = arith.constant 0 : i32
    %c0_i32_0 = arith.constant 0 : i32
    %c0_i32_1 = arith.constant 0 : i32
    return %c0_i32, %c0_i32_0 : i32, i32
  }
  func.func @transform_3(%arg0: i32) -> (i32, i32) {
    %c0_i32 = arith.constant 0 : i32
    %c0_i32_0 = arith.constant 0 : i32
    %c0_i32_1 = arith.constant 0 : i32
    return %c0_i32, %c0_i32_0 : i32, i32
  }
  func.func @transform_4(%arg0: i32) -> (i32, i32) {
    %c0_i32 = arith.constant 0 : i32
    %c0_i32_0 = arith.constant 0 : i32
    return %arg0, %c0_i32 : i32, i32
  }
  func.func @transform_5(%arg0: i32) -> (i32, i32) {
    %c0_i32 = arith.constant 0 : i32
    %c0_i32_0 = arith.constant 0 : i32
    return %arg0, %c0_i32 : i32, i32
  }
}

</mosaic_0001>

<llo_original>
// kernel: tpu_custom_call.1
$region0: #{tpu_custom_call.1}
  #allocation0 [shape = 'u32[]', space=smem, size = 0x4, offset = 0x4, fixed_abs, tag = 'smem constant byte address 0x4 - core index']
  #allocation1 [shape = 'u32[72,128]{1,0:T(1,128)}', space=vmem, size = 0x9000, scoped, tag = 'internal scratch']
  %s0 = inlined_call_operand.hbm [shape: f32[2,1,32], index: 0, kind: input, shape index: {}]
  %s1 = inlined_call_operand.hbm [shape: f32[2,8,16], index: 1, kind: input, shape index: {}]
  %s2 = inlined_call_operand.hbm [shape: bf16[16,32], index: 2, kind: input, shape index: {}]
  %s3 = inlined_call_operand.vmem [shape: f32[1,32], index: 3, kind: input, shape index: {}]
  %s4 = inlined_call_operand.hbm [shape: f32[2,16], index: 4, kind: output, shape index: {0}]
  %s5 = inlined_call_operand.hbm [shape: f32[2,8], index: 5, kind: output, shape index: {1}]
  %6 = xla_tuple %s4, %s5
  %s7 = sld [smem:[#allocation0]]
  $region46: #{tpu_custom_call.1} parent=0
    _
  %s9 = ssub.s32 1, %s7
  %s10 = scalar_select 0, %s9, %s7
  $region1: #{tpu_custom_call.1} parent=0
    #allocation2 [shape = 'u8[4096]{0}', space=vmem, size = 0x1000, scoped, tag = 'input window, operand 0, single buffered']
    #allocation3 [shape = 's32[1]{0}', space=sflag, size = 0x4, scoped, tag = 'scoped memory for tpu_custom_call.1']
    #allocation4 [shape = 's32[1]{0}', space=sflag, size = 0x4, scoped, tag = 'scoped memory for tpu_custom_call.1']
    #allocation5 [shape = 'u8[32768]{0}', space=vmem, size = 0x8000, scoped, tag = 'input window, operand 1, single buffered']
    #allocation6 [shape = 's32[1]{0}', space=sflag, size = 0x4, scoped, tag = 'scoped memory for tpu_custom_call.1']
    #allocation7 [shape = 'u8[4096]{0}', space=vmem, size = 0x1000, scoped, tag = 'input window, operand 2, single buffered']
    #allocation8 [shape = 'u8[4096]{0}', space=vmem, size = 0x1000, scoped, tag = 'output window, operand 0, single buffered']
    #allocation9 [shape = 'u8[4096]{0}', space=vmem, size = 0x1000, scoped, tag = 'output window, operand 1, single buffered']
    #allocation10 [shape = 's32[1]{0}', space=sflag, size = 0x4, scoped, tag = 'scoped memory for tpu_custom_call.1']
    %11 = vsyncpa [#allocation3], 0
    %12 = vsyncpa [#allocation6], 0
    %13 = vsyncpa [#allocation4], 0
    %14 = vsyncpa [#allocation10], 0
    // Predicated region
    $region2: #{tpu_custom_call.1} parent=1 // pred_check
      _
    $region3: #{tpu_custom_call.1} parent=1 // pred_check_branch
      %16 = sbr.rel (0) target = $region5
    $region4: #{tpu_custom_call.1} parent=1 // pred_region
      %18 = vsyncadd [#allocation3], 96
      %s19 = sshll.u32 %s0, 4
      %s20 = int_to_ptr.hbm [resolvable:$true] %s19
      %s21 = sshll.u32 [#allocation2], 4
      %s22 = int_to_ptr.vmem [resolvable:$true] %s21
      %27 = dma.hbm_to_vmem [thread:$0]  %s20, 32, %s22, [#allocation3], 16, 16, 1
    $region5: #{tpu_custom_call.1} parent=1 // pred_fallthru
      _
    // Predicated region
    $region6: #{tpu_custom_call.1} parent=1 // pred_check
      _
    $region7: #{tpu_custom_call.1} parent=1 // pred_check_branch
      %29 = sbr.rel (0) target = $region9
    $region8: #{tpu_custom_call.1} parent=1 // pred_region
      %31 = vsyncadd [#allocation6], 768
      %s32 = sshll.u32 %s1, 4
      %s33 = int_to_ptr.hbm [resolvable:$true] %s32
      %s34 = sshll.u32 [#allocation5], 4
      %s35 = int_to_ptr.vmem [resolvable:$true] %s34
      %40 = dma.hbm_to_vmem [thread:$0]  %s33, 256, %s35, [#allocation6], 128, 128, 8
    $region9: #{tpu_custom_call.1} parent=1 // pred_fallthru
      _
    // Predicated region
    $region10: #{tpu_custom_call.1} parent=1 // pred_check
      _
    $region11: #{tpu_custom_call.1} parent=1 // pred_check_branch
      %42 = sbr.rel (0) target = $region13
    $region12: #{tpu_custom_call.1} parent=1 // pred_region
      %44 = vsyncadd [#allocation6], 0
      %s45 = sshll.u32 %s2, 4
      %s46 = int_to_ptr.hbm [resolvable:$true] %s45
      %s47 = sshll.u32 [#allocation7], 4
      %s48 = int_to_ptr.vmem [resolvable:$true] %s47
      %53 = dma.hbm_to_vmem [thread:$0]  %s46, 128, %s48, [#allocation6], 64, 64, 4
    $region13: #{tpu_custom_call.1} parent=1 // pred_fallthru
      _
    // Predicated region
    $region14: #{tpu_custom_call.1} parent=1 // pred_check
      _
    $region15: #{tpu_custom_call.1} parent=1 // pred_check_branch
      %55 = sbr.rel (0) target = $region17
    $region16: #{tpu_custom_call.1} parent=1 // pred_region
      _
    $region17: #{tpu_custom_call.1} parent=1 // pred_fallthru
      _
    // Predicated region
    $region18: #{tpu_custom_call.1} parent=1 // pred_check
      _
    $region19: #{tpu_custom_call.1} parent=1 // pred_check_branch
      %57 = sbr.rel (0) target = $region21
    $region20: #{tpu_custom_call.1} parent=1 // pred_region
      %59 = dma.done [#allocation3], 128
    $region21: #{tpu_custom_call.1} parent=1 // pred_fallthru
      _
    // Predicated region
    $region22: #{tpu_custom_call.1} parent=1 // pred_check
      _
    $region23: #{tpu_custom_call.1} parent=1 // pred_check_branch
      %61 = sbr.rel (0) target = $region25
    $region24: #{tpu_custom_call.1} parent=1 // pred_region
      %63 = dma.done [#allocation6], 1024
    $region25: #{tpu_custom_call.1} parent=1 // pred_fallthru
      _
    // Predicated region
    $region26: #{tpu_custom_call.1} parent=1 // pred_check
      _
    $region27: #{tpu_custom_call.1} parent=1 // pred_check_branch
      %65 = sbr.rel (0) target = $region29
    $region28: #{tpu_custom_call.1} parent=1 // pred_region
      %67 = dma.done [#allocation6], 128
    $region29: #{tpu_custom_call.1} parent=1 // pred_fallthru
      _
    %v69 = vld [vmem:[#allocation5] sm:$0xff]
    %v70 = vld [vmem:[#allocation5 + $0x8] sm:$0xff]
    %v71 = vld [vmem:[#allocation5 + $0x10] sm:$0xff]
    %v72 = vld [vmem:[#allocation5 + $0x18] sm:$0xff]
    %v73 = vld [vmem:[#allocation5 + $0x20] sm:$0xff]
    %v74 = vld [vmem:[#allocation5 + $0x28] sm:$0xff]
    %v75 = vld [vmem:[#allocation5 + $0x30] sm:$0xff]
    %v76 = vld [vmem:[#allocation5 + $0x38] sm:$0xff]
    %v77 = vpack.c.bf16 %v70, %v69
    %v78 = vpack.c.bf16 %v72, %v71
    %v79 = vpack.c.bf16 %v74, %v73
    %v80 = vpack.c.bf16 %v76, %v75
    %v81 = vld [vmem:[#allocation7] sm:$0xf]
    %v82 = vld [vmem:[#allocation7 + $0x4] sm:$0xf]
    %v85 = vunpack.c.l.b16 %v81
    %v86 = vunpack.c.l.b16 %v82
    %v87 = vpack.c.b16 %v86, %v85
    %vm89 = vcmask 130048
    %v91 = vsel %vm89, %v77, 0
    %v94 = vsel %vm89, %v78, 0
    %v97 = vsel %vm89, %v79, 0
    %v100 = vsel %vm89, %v80, 0
    %102 = vmatpush.bf16.msra.mxu0 0
    %103 = vmatpush.bf16.msra.mxu0 0
    %104 = vmatpush.bf16.msra.mxu0 0
    %105 = vmatpush.bf16.msra.mxu0 0
    %106 = vmatpush.bf16.msra.mxu0 0
    %107 = vmatpush.bf16.msra.mxu0 0
    %108 = vmatpush.bf16.msra.mxu0 0
    %109 = vmatpush.bf16.msra.mxu0 %v87
    %110 = vmatmul.bf16.gmra.mxu0 %v91
    %v111 = vpop.f32.mrf.mxu0
    %v112 = vadd.f32 0.0, %v111
    %v113 = vpop.f32.mrf.mxu0
    %v114 = vadd.f32 0.0, %v113
    %115 = vmatmul.bf16.gmra.mxu0 %v94
    %v116 = vpop.f32.mrf.mxu0
    %v117 = vadd.f32 0.0, %v116
    %v118 = vpop.f32.mrf.mxu0
    %v119 = vadd.f32 0.0, %v118
    %120 = vmatmul.bf16.gmra.mxu0 %v97
    %v121 = vpop.f32.mrf.mxu0
    %v122 = vadd.f32 0.0, %v121
    %v123 = vpop.f32.mrf.mxu0
    %v124 = vadd.f32 0.0, %v123
    %125 = vmatmul.bf16.gmra.mxu0 %v100
    %v126 = vpop.f32.mrf.mxu0
    %v127 = vadd.f32 0.0, %v126
    %v128 = vpop.f32.mrf.mxu0
    %v129 = vadd.f32 0.0, %v128
    %130 = vdwg.mxu0
    %v131 = vld [vmem:[#allocation2] sm:$0x1]
    %v132 = vld [vmem:[#allocation2 + $0x1] sm:$0x1]
    %v133 = vld [vmem:[#allocation2 + $0x2] sm:$0x1]
    %v134 = vld [vmem:[#allocation2 + $0x3] sm:$0x1]
    %v135 = vld [vmem:[#allocation2 + $0x4] sm:$0x1]
    %v136 = vld [vmem:[#allocation2 + $0x5] sm:$0x1]
    %v137 = vld [vmem:[#allocation2 + $0x6] sm:$0x1]
    %v138 = vld [vmem:[#allocation2 + $0x7] sm:$0x1]
    %v147 = vperm.slane %v131, 0
    %v148 = vperm.slane %v132, 0
    %v149 = vperm.slane %v133, 0
    %v150 = vperm.slane %v134, 0
    %v151 = vperm.slane %v135, 0
    %v152 = vperm.slane %v136, 0
    %v153 = vperm.slane %v137, 0
    %v154 = vperm.slane %v138, 0
    %v163 = vadd.f32 %v112, %v147
    %v164 = vadd.f32 %v114, %v148
    %v165 = vadd.f32 %v117, %v149
    %v166 = vadd.f32 %v119, %v150
    %v167 = vadd.f32 %v122, %v151
    %v168 = vadd.f32 %v124, %v152
    %v169 = vadd.f32 %v127, %v153
    %v170 = vadd.f32 %v129, %v154
    %v171 = vtanh.pop %v163
    %v172 = vtanh.pop %v164
    %v173 = vtanh.pop %v165
    %v174 = vtanh.pop %v166
    %v175 = vtanh.pop %v167
    %v176 = vtanh.pop %v168
    %v177 = vtanh.pop %v169
    %v178 = vtanh.pop %v170
    %v179 = vld [vmem:[%s3] sm:$0x1]
    %v181 = vperm.slane %v179, 0
    %v183 = vmul.f32 %v171, %v181
    %v184 = vmul.f32 %v172, %v181
    %v185 = vmul.f32 %v173, %v181
    %v186 = vmul.f32 %v174, %v181
    %v187 = vmul.f32 %v175, %v181
    %v188 = vmul.f32 %v176, %v181
    %v189 = vmul.f32 %v177, %v181
    %v190 = vmul.f32 %v178, %v181
    %vm191 = vcmask 261120
    %v192 = vsel %vm191, %v183, 0.0
    %193 = vadd.xlane.f32.xlu0 %v192
    %v194 = vpop.xlane.xlu0 %193
    %v195 = vsel %vm191, %v184, 0.0
    %196 = vadd.xlane.f32.xlu0 %v195
    %v197 = vpop.xlane.xlu0 %196
    %v198 = vsel %vm191, %v185, 0.0
    %199 = vadd.xlane.f32.xlu0 %v198
    %v200 = vpop.xlane.xlu0 %199
    %v201 = vsel %vm191, %v186, 0.0
    %202 = vadd.xlane.f32.xlu0 %v201
    %v203 = vpop.xlane.xlu0 %202
    %v204 = vsel %vm191, %v187, 0.0
    %205 = vadd.xlane.f32.xlu0 %v204
    %v206 = vpop.xlane.xlu0 %205
    %v207 = vsel %vm191, %v188, 0.0
    %208 = vadd.xlane.f32.xlu0 %v207
    %v209 = vpop.xlane.xlu0 %208
    %v210 = vsel %vm191, %v189, 0.0
    %211 = vadd.xlane.f32.xlu0 %v210
    %v212 = vpop.xlane.xlu0 %211
    %v213 = vsel %vm191, %v190, 0.0
    %214 = vadd.xlane.f32.xlu0 %v213
    %v215 = vpop.xlane.xlu0 %214
    %v224 = vlaneseq
    %v225 = vand.u32 %v224, 127
    %v226 = vperm.slane %v194, %v225
    %v227 = vperm.slane %v197, %v225
    %v228 = vperm.slane %v200, %v225
    %v229 = vperm.slane %v203, %v225
    %v230 = vperm.slane %v206, %v225
    %v231 = vperm.slane %v209, %v225
    %v232 = vperm.slane %v212, %v225
    %v233 = vperm.slane %v215, %v225
    %vm234 = vcmask 1041409
    %v235 = vsel %vm234, %v227, %v226
    %vm236 = vcmask 1042434
    %v237 = vsel %vm236, %v228, %v235
    %vm238 = vcmask 1043459
    %v239 = vsel %vm238, %v229, %v237
    %vm240 = vcmask 1044484
    %v241 = vsel %vm240, %v230, %v239
    %vm242 = vcmask 1045509
    %v243 = vsel %vm242, %v231, %v241
    %vm244 = vcmask 1046534
    %v245 = vsel %vm244, %v232, %v243
    %vm246 = vcmask 1047559
    %v247 = vsel %vm246, %v233, %v245
    %vm249 = vcmask 64512
    %v250 = vsel %vm249, %v247, -inf
    %251 = vmax.xlane.f32.xlu0 %v250
    %v252 = vpop.xlane.xlu0 %251
    %v254 = vperm.slane %v252, 0
    %v255 = vperm.slane %v252, 1
    %v256 = vperm.slane %v252, 2
    %v257 = vperm.slane %v252, 3
    %v258 = vperm.slane %v252, 4
    %v259 = vperm.slane %v252, 5
    %v260 = vperm.slane %v252, 6
    %v261 = vperm.slane %v252, 7
    %v270 = vsub.f32 %v194, %v254
    %v271 = vsub.f32 %v197, %v255
    %v272 = vsub.f32 %v200, %v256
    %v273 = vsub.f32 %v203, %v257
    %v274 = vsub.f32 %v206, %v258
    %v275 = vsub.f32 %v209, %v259
    %v276 = vsub.f32 %v212, %v260
    %v277 = vsub.f32 %v215, %v261
    %v278 = vmul.f32 %v270, 1.442695
    %v279 = vpow.pop %v278
    %v280 = vmul.f32 %v271, 1.442695
    %v281 = vpow.pop %v280
    %v282 = vmul.f32 %v272, 1.442695
    %v283 = vpow.pop %v282
    %v284 = vmul.f32 %v273, 1.442695
    %v285 = vpow.pop %v284
    %v286 = vmul.f32 %v274, 1.442695
    %v287 = vpow.pop %v286
    %v288 = vmul.f32 %v275, 1.442695
    %v289 = vpow.pop %v288
    %v290 = vmul.f32 %v276, 1.442695
    %v291 = vpow.pop %v290
    %v292 = vmul.f32 %v277, 1.442695
    %v293 = vpow.pop %v292
    %302 = vset.pattern.permute.xlu0 0
    %303 = vperm.xlu0 %302, %v279
    %v304 = vpop.permute.xlu0 %303
    %305 = vset.pattern.permute.xlu0 0
    %306 = vperm.xlu0 %305, %v281
    %v307 = vpop.permute.xlu0 %306
    %308 = vset.pattern.permute.xlu0 0
    %309 = vperm.xlu0 %308, %v283
    %v310 = vpop.permute.xlu0 %309
    %311 = vset.pattern.permute.xlu0 0
    %312 = vperm.xlu0 %311, %v285
    %v313 = vpop.permute.xlu0 %312
    %314 = vset.pattern.permute.xlu0 0
    %315 = vperm.xlu0 %314, %v287
    %v316 = vpop.permute.xlu0 %315
    %317 = vset.pattern.permute.xlu0 0
    %318 = vperm.xlu0 %317, %v289
    %v319 = vpop.permute.xlu0 %318
    %320 = vset.pattern.permute.xlu0 0
    %321 = vperm.xlu0 %320, %v291
    %v322 = vpop.permute.xlu0 %321
    %323 = vset.pattern.permute.xlu0 0
    %324 = vperm.xlu0 %323, %v293
    %v325 = vpop.permute.xlu0 %324
    %v326 = vperm.slane %v304, %v225
    %v327 = vperm.slane %v307, %v225
    %v328 = vperm.slane %v310, %v225
    %v329 = vperm.slane %v313, %v225
    %v330 = vperm.slane %v316, %v225
    %v331 = vperm.slane %v319, %v225
    %v332 = vperm.slane %v322, %v225
    %v333 = vperm.slane %v325, %v225
    %v334 = vsel %vm234, %v327, %v326
    %v335 = vsel %vm236, %v328, %v334
    %v336 = vsel %vm238, %v329, %v335
    %v337 = vsel %vm240, %v330, %v336
    %v338 = vsel %vm242, %v331, %v337
    %v339 = vsel %vm244, %v332, %v338
    %v340 = vsel %vm246, %v333, %v339
    %v342 = vsel %vm249, %v340, 0.0
    %343 = vadd.xlane.f32.xlu0 %v342
    %v344 = vpop.xlane.xlu0 %343
    %v346 = vperm.slane %v344, 0
    %v347 = vperm.slane %v344, 1
    %v348 = vperm.slane %v344, 2
    %v349 = vperm.slane %v344, 3
    %v350 = vperm.slane %v344, 4
    %v351 = vperm.slane %v344, 5
    %v352 = vperm.slane %v344, 6
    %v353 = vperm.slane %v344, 7
    %v362 = vrcp.pop %v346
    %v363 = vmul.f32 %v346, %v362
    %v364 = vsub.f32 1.0, %v363
    %v365 = vmul.f32 %v362, %v364
    %v366 = vadd.f32 %v362, %v365
    %vm367 = vweird.f32 %v346
    %vm368 = vweird.f32 %v362
    %vm369 = vmor %vm367, %vm368
    %v370 = vsel %vm369, %v362, %v366
    %v371 = vand.u32 2147483647, %v346
    %vm372 = vcmp.eq.f32.partialorder %v371, 8.507059e+37
    %v373 = vand.u32 %v346, 2147483648
    %v374 = vor.u32 1.1754944e-38, %v373
    %v375 = vsel %vm372, %v374, %v370
    %v376 = vmul.f32 %v279, %v375
    %v377 = vrcp.pop %v347
    %v378 = vmul.f32 %v347, %v377
    %v379 = vsub.f32 1.0, %v378
    %v380 = vmul.f32 %v377, %v379
    %v381 = vadd.f32 %v377, %v380
    %vm382 = vweird.f32 %v347
    %vm383 = vweird.f32 %v377
    %vm384 = vmor %vm382, %vm383
    %v385 = vsel %vm384, %v377, %v381
    %v386 = vand.u32 2147483647, %v347
    %vm387 = vcmp.eq.f32.partialorder %v386, 8.507059e+37
    %v388 = vand.u32 %v347, 2147483648
    %v389 = vor.u32 1.1754944e-38, %v388
    %v390 = vsel %vm387, %v389, %v385
    %v391 = vmul.f32 %v281, %v390
    %v392 = vrcp.pop %v348
    %v393 = vmul.f32 %v348, %v392
    %v394 = vsub.f32 1.0, %v393
    %v395 = vmul.f32 %v392, %v394
    %v396 = vadd.f32 %v392, %v395
    %vm397 = vweird.f32 %v348
    %vm398 = vweird.f32 %v392
    %vm399 = vmor %vm397, %vm398
    %v400 = vsel %vm399, %v392, %v396
    %v401 = vand.u32 2147483647, %v348
    %vm402 = vcmp.eq.f32.partialorder %v401, 8.507059e+37
    %v403 = vand.u32 %v348, 2147483648
    %v404 = vor.u32 1.1754944e-38, %v403
    %v405 = vsel %vm402, %v404, %v400
    %v406 = vmul.f32 %v283, %v405
    %v407 = vrcp.pop %v349
    %v408 = vmul.f32 %v349, %v407
    %v409 = vsub.f32 1.0, %v408
    %v410 = vmul.f32 %v407, %v409
    %v411 = vadd.f32 %v407, %v410
    %vm412 = vweird.f32 %v349
    %vm413 = vweird.f32 %v407
    %vm414 = vmor %vm412, %vm413
    %v415 = vsel %vm414, %v407, %v411
    %v416 = vand.u32 2147483647, %v349
    %vm417 = vcmp.eq.f32.partialorder %v416, 8.507059e+37
    %v418 = vand.u32 %v349, 2147483648
    %v419 = vor.u32 1.1754944e-38, %v418
    %v420 = vsel %vm417, %v419, %v415
    %v421 = vmul.f32 %v285, %v420
    %v422 = vrcp.pop %v350
    %v423 = vmul.f32 %v350, %v422
    %v424 = vsub.f32 1.0, %v423
    %v425 = vmul.f32 %v422, %v424
    %v426 = vadd.f32 %v422, %v425
    %vm427 = vweird.f32 %v350
    %vm428 = vweird.f32 %v422
    %vm429 = vmor %vm427, %vm428
    %v430 = vsel %vm429, %v422, %v426
    %v431 = vand.u32 2147483647, %v350
    %vm432 = vcmp.eq.f32.partialorder %v431, 8.507059e+37
    %v433 = vand.u32 %v350, 2147483648
    %v434 = vor.u32 1.1754944e-38, %v433
    %v435 = vsel %vm432, %v434, %v430
    %v436 = vmul.f32 %v287, %v435
    %v437 = vrcp.pop %v351
    %v438 = vmul.f32 %v351, %v437
    %v439 = vsub.f32 1.0, %v438
    %v440 = vmul.f32 %v437, %v439
    %v441 = vadd.f32 %v437, %v440
    %vm442 = vweird.f32 %v351
    %vm443 = vweird.f32 %v437
    %vm444 = vmor %vm442, %vm443
    %v445 = vsel %vm444, %v437, %v441
    %v446 = vand.u32 2147483647, %v351
    %vm447 = vcmp.eq.f32.partialorder %v446, 8.507059e+37
    %v448 = vand.u32 %v351, 2147483648
    %v449 = vor.u32 1.1754944e-38, %v448
    %v450 = vsel %vm447, %v449, %v445
    %v451 = vmul.f32 %v289, %v450
    %v452 = vrcp.pop %v352
    %v453 = vmul.f32 %v352, %v452
    %v454 = vsub.f32 1.0, %v453
    %v455 = vmul.f32 %v452, %v454
    %v456 = vadd.f32 %v452, %v455
    %vm457 = vweird.f32 %v352
    %vm458 = vweird.f32 %v452
    %vm459 = vmor %vm457, %vm458
    %v460 = vsel %vm459, %v452, %v456
    %v461 = vand.u32 2147483647, %v352
    %vm462 = vcmp.eq.f32.partialorder %v461, 8.507059e+37
    %v463 = vand.u32 %v352, 2147483648
    %v464 = vor.u32 1.1754944e-38, %v463
    %v465 = vsel %vm462, %v464, %v460
    %v466 = vmul.f32 %v291, %v465
    %v467 = vrcp.pop %v353
    %v468 = vmul.f32 %v353, %v467
    %v469 = vsub.f32 1.0, %v468
    %v470 = vmul.f32 %v467, %v469
    %v471 = vadd.f32 %v467, %v470
    %vm472 = vweird.f32 %v353
    %vm473 = vweird.f32 %v467
    %vm474 = vmor %vm472, %vm473
    %v475 = vsel %vm474, %v467, %v471
    %v476 = vand.u32 2147483647, %v353
    %vm477 = vcmp.eq.f32.partialorder %v476, 8.507059e+37
    %v478 = vand.u32 %v353, 2147483648
    %v479 = vor.u32 1.1754944e-38, %v478
    %v480 = vsel %vm477, %v479, %v475
    %v481 = vmul.f32 %v293, %v480
    %490 = vset.pattern.permute.xlu0 0
    %491 = vperm.xlu0 %490, %v376
    %v492 = vpop.permute.xlu0 %491
    %493 = vset.pattern.permute.xlu0 0
    %494 = vperm.xlu0 %493, %v391
    %v495 = vpop.permute.xlu0 %494
    %496 = vset.pattern.permute.xlu0 0
    %497 = vperm.xlu0 %496, %v406
    %v498 = vpop.permute.xlu0 %497
    %499 = vset.pattern.permute.xlu0 0
    %500 = vperm.xlu0 %499, %v421
    %v501 = vpop.permute.xlu0 %500
    %502 = vset.pattern.permute.xlu0 0
    %503 = vperm.xlu0 %502, %v436
    %v504 = vpop.permute.xlu0 %503
    %505 = vset.pattern.permute.xlu0 0
    %506 = vperm.xlu0 %505, %v451
    %v507 = vpop.permute.xlu0 %506
    %508 = vset.pattern.permute.xlu0 0
    %509 = vperm.xlu0 %508, %v466
    %v510 = vpop.permute.xlu0 %509
    %511 = vset.pattern.permute.xlu0 0
    %512 = vperm.xlu0 %511, %v481
    %v513 = vpop.permute.xlu0 %512
    %v514 = vperm.slane %v492, %v225
    %v515 = vperm.slane %v495, %v225
    %v516 = vperm.slane %v498, %v225
    %v517 = vperm.slane %v501, %v225
    %v518 = vperm.slane %v504, %v225
    %v519 = vperm.slane %v507, %v225
    %v520 = vperm.slane %v510, %v225
    %v521 = vperm.slane %v513, %v225
    %v522 = vsel %vm234, %v515, %v514
    %v523 = vsel %vm236, %v516, %v522
    %v524 = vsel %vm238, %v517, %v523
    %v525 = vsel %vm240, %v518, %v524
    %v526 = vsel %vm242, %v519, %v525
    %v527 = vsel %vm244, %v520, %v526
    %v528 = vsel %vm246, %v521, %v527
    %530 = vst.msk [vmem:[#allocation9] sm:$0xff] %vm249, %v528
    %v539 = vmul.f32 %v69, %v492
    %v540 = vmul.f32 %v70, %v495
    %v541 = vmul.f32 %v71, %v498
    %v542 = vmul.f32 %v72, %v501
    %v543 = vmul.f32 %v73, %v504
    %v544 = vmul.f32 %v74, %v507
    %v545 = vmul.f32 %v75, %v510
    %v546 = vmul.f32 %v76, %v513
    %v547 = vsel %vm89, %v539, 0.0
    %v548 = vrot.slane %v547, 4
    %v549 = vadd.f32 %v547, %v548
    %v550 = vrot.slane %v549, 2
    %v551 = vadd.f32 %v549, %v550
    %v552 = vrot.slane %v551, 1
    %v553 = vadd.f32 %v551, %v552
    %v554 = vsel %vm89, %v540, 0.0
    %v555 = vrot.slane %v554, 4
    %v556 = vadd.f32 %v554, %v555
    %v557 = vrot.slane %v556, 2
    %v558 = vadd.f32 %v556, %v557
    %v559 = vrot.slane %v558, 1
    %v560 = vadd.f32 %v558, %v559
    %v561 = vsel %vm89, %v541, 0.0
    %v562 = vrot.slane %v561, 4
    %v563 = vadd.f32 %v561, %v562
    %v564 = vrot.slane %v563, 2
    %v565 = vadd.f32 %v563, %v564
    %v566 = vrot.slane %v565, 1
    %v567 = vadd.f32 %v565, %v566
    %v568 = vsel %vm89, %v542, 0.0
    %v569 = vrot.slane %v568, 4
    %v570 = vadd.f32 %v568, %v569
    %v571 = vrot.slane %v570, 2
    %v572 = vadd.f32 %v570, %v571
    %v573 = vrot.slane %v572, 1
    %v574 = vadd.f32 %v572, %v573
    %v575 = vsel %vm89, %v543, 0.0
    %v576 = vrot.slane %v575, 4
    %v577 = vadd.f32 %v575, %v576
    %v578 = vrot.slane %v577, 2
    %v579 = vadd.f32 %v577, %v578
    %v580 = vrot.slane %v579, 1
    %v581 = vadd.f32 %v579, %v580
    %v582 = vsel %vm89, %v544, 0.0
    %v583 = vrot.slane %v582, 4
    %v584 = vadd.f32 %v582, %v583
    %v585 = vrot.slane %v584, 2
    %v586 = vadd.f32 %v584, %v585
    %v587 = vrot.slane %v586, 1
    %v588 = vadd.f32 %v586, %v587
    %v589 = vsel %vm89, %v545, 0.0
    %v590 = vrot.slane %v589, 4
    %v591 = vadd.f32 %v589, %v590
    %v592 = vrot.slane %v591, 2
    %v593 = vadd.f32 %v591, %v592
    %v594 = vrot.slane %v593, 1
    %v595 = vadd.f32 %v593, %v594
    %v596 = vsel %vm89, %v546, 0.0
    %v597 = vrot.slane %v596, 4
    %v598 = vadd.f32 %v596, %v597
    %v599 = vrot.slane %v598, 2
    %v600 = vadd.f32 %v598, %v599
    %v601 = vrot.slane %v600, 1
    %v602 = vadd.f32 %v600, %v601
    %v611 = vsel %vm234, %v560, %v553
    %v612 = vsel %vm236, %v567, %v611
    %v613 = vsel %vm238, %v574, %v612
    %v614 = vsel %vm240, %v581, %v613
    %v615 = vsel %vm242, %v588, %v614
    %v616 = vsel %vm244, %v595, %v615
    %v617 = vsel %vm246, %v602, %v616
    %619 = vst.msk [vmem:[#allocation8] sm:$0xff] %vm89, %v617
    // Predicated region
    $region30: #{tpu_custom_call.1} parent=1 // pred_check
      _
    $region31: #{tpu_custom_call.1} parent=1 // pred_check_branch
      %621 = sbr.rel (0) target = $region33
    $region32: #{tpu_custom_call.1} parent=1 // pred_region
      %623 = vsyncadd [#allocation4], 96
      %s624 = sshll.u32 [#allocation8], 4
      %s625 = int_to_ptr.vmem [resolvable:$true] %s624
      %s626 = sshll.u32 %s4, 4
      %s627 = int_to_ptr.hbm [resolvable:$true] %s626
      %632 = dma.vmem_to_hbm [thread:$0]  %s625, 32, %s627, [#allocation4], 32, 32, 2
    $region33: #{tpu_custom_call.1} parent=1 // pred_fallthru
      _
    // Predicated region
    $region34: #{tpu_custom_call.1} parent=1 // pred_check
      _
    $region35: #{tpu_custom_call.1} parent=1 // pred_check_branch
      %634 = sbr.rel (0) target = $region37
    $region36: #{tpu_custom_call.1} parent=1 // pred_region
      %636 = vsyncadd [#allocation10], 96
      %s637 = sshll.u32 [#allocation9], 4
      %s638 = int_to_ptr.vmem [resolvable:$true] %s637
      %s639 = sshll.u32 %s5, 4
      %s640 = int_to_ptr.hbm [resolvable:$true] %s639
      %645 = dma.vmem_to_hbm [thread:$0]  %s638, 32, %s640, [#allocation10], 32, 32, 2
    $region37: #{tpu_custom_call.1} parent=1 // pred_fallthru
      _
    // Predicated region
    $region38: #{tpu_custom_call.1} parent=1 // pred_check
      _
    $region39: #{tpu_custom_call.1} parent=1 // pred_check_branch
      %647 = sbr.rel (0) target = $region41
    $region40: #{tpu_custom_call.1} parent=1 // pred_region
      %649 = dma.done [#allocation4], 128
    $region41: #{tpu_custom_call.1} parent=1 // pred_fallthru
      _
    // Predicated region
    $region42: #{tpu_custom_call.1} parent=1 // pred_check
      _
    $region43: #{tpu_custom_call.1} parent=1 // pred_check_branch
      %651 = sbr.rel (0) target = $region45
    $region44: #{tpu_custom_call.1} parent=1 // pred_region
      %653 = dma.done [#allocation10], 128
    $region45: #{tpu_custom_call.1} parent=1 // pred_fallthru
      _
    %654 = vsyncpa [#allocation3], 1
    %655 = vsyncpa [#allocation6], 1
    %656 = vsyncpa [#allocation4], 1
    %657 = vsyncpa [#allocation10], 1

</llo_original>
